<compile_context>
chip_gen: v6e
topology: v6e:2x2x1
jax: 0.10.0
libtpu: 0.0.40
codegen_flags: <defaults>
</compile_context>

<pallas_src>
import functools

import jax
import jax.numpy as jnp
from jax import lax
from jax.experimental import pallas as pl
from jax.experimental.pallas import tpu as pltpu


def _round_up(v, m):
    return ((v + m - 1) // m) * m


def _vmem_budget_bytes():
    """~85% of physical VMEM: headroom for Mosaic internal scratch / spills."""
    try:
        cap = int(pltpu.get_tpu_info().vmem_capacity_bytes)
    except Exception:  # fallback: assume the tightest part (v7x, 64 MiB per TC)
        cap = 64 << 20
    return int(cap * 0.85)


# ---------------------------------------------------------------------------
# Phase 1: gram accumulation + column softmax + fold -> W1' = (attn + I) @ W1
# ---------------------------------------------------------------------------
def _gram_fold_kernel(x_ref, w1_ref, w1p_ref, gram_ref):
    @pl.when(pl.program_id(0) == 0)
    def _():
        gram_ref[...] = jnp.zeros_like(gram_ref)

    x = x_ref[...]
    # x^T @ x without materializing the transpose: contract axis 0 of both.
    gram_ref[...] += lax.dot_general(
        x, x,
        dimension_numbers=(((0,), (0,)), ((), ())),
        preferred_element_type=jnp.float32,
    )

    @pl.when(pl.program_id(0) == pl.num_programs(0) - 1)
    def _():
        g = gram_ref[...]
        c = g.shape[0]
        # nn.Softmax(dim=0): normalize each column over rows.  Approx EUP
        # reciprocal: columns sum to 1 only to ~1e-3 relative accuracy.
        m = jnp.max(g, axis=0, keepdims=True)
        e = jnp.exp(g - m)
        inv = pl.reciprocal(jnp.sum(e, axis=0, keepdims=True), approx=True)
        attn = e * inv
        # Fold the residual: attn + I (identity via 2-D iota equality mask).
        rows = lax.broadcasted_iota(jnp.int32, (c, c), 0)
        cols = lax.broadcasted_iota(jnp.int32, (c, c), 1)
        attn_plus_i = attn + (rows == cols).astype(jnp.float32)
        # One-time (C,C)x(C,H) matmul, kept in f32 for precision (cost is
        # negligible: it runs once per forward, not per row tile).
        w1p_ref[...] = jnp.dot(
            attn_plus_i, w1_ref[...].astype(jnp.float32),
            preferred_element_type=jnp.float32,
        )


# ---------------------------------------------------------------------------
# Phase 2: per-row-tile   h = relu(x @ W1' + b1) ; out = h @ W2 + b2
# ---------------------------------------------------------------------------
def _mlp_kernel(x_ref, w1p_ref, b1_ref, w2_ref, b2_ref, out_ref):
    h = (jnp.dot(x_ref[...], w1p_ref[...], preferred_element_type=jnp.float32)
         + b1_ref[...].astype(jnp.float32))
    h = jnp.maximum(h, 0.0)
    out = (jnp.dot(h.astype(w2_ref.dtype), w2_ref[...],
                   preferred_element_type=jnp.float32)
           + b2_ref[...].astype(jnp.float32))
    out_ref[...] = out.astype(out_ref.dtype)


@functools.partial(jax.jit, static_argnames=("operand_dtype",))
def classifier_mlp(x, w1, b1, w2, b2, *, operand_dtype=jnp.bfloat16):
    """x: (N, in_ch). w1: (in_ch, hidden). w2: (hidden, num_classes).

    operand_dtype (default bf16, the MXU fast path on v6e/v7x) is the operand
    dtype for x / W1 / W2 / W1'; every matmul accumulates in f32 via
    preferred_element_type.  Pass operand_dtype=None for f32 operands.
    """
    N, C = x.shape
    H = w1.shape[1]
    num_classes = w2.shape[1]

    if operand_dtype is not None:
        x = x.astype(operand_dtype)
        w1 = w1.astype(operand_dtype)
        w2 = w2.astype(operand_dtype)
    itemsize = jnp.dtype(x.dtype).itemsize

    cp = _round_up(max(num_classes, 128), 128)       # lane-dense padded classes

    # ---- generation-aware VMEM budget and row-tile size ----------------------
    budget = _vmem_budget_bytes()
    # Tile-size-independent VMEM (default double-buffering assumed for every
    # BlockSpec, including the constant-index resident blocks) plus scratch.
    fixed_p1 = 2 * C * H * itemsize + 2 * C * H * 4 + C * C * 4       # W1, W1', gram
    fixed_p2 = (2 * C * H * itemsize + 2 * H * 4
                + 2 * H * cp * itemsize + 2 * cp * 4)                 # W1', b1, W2p, b2p
    fixed = max(fixed_p1, fixed_p2)
    per_row = 2 * C * itemsize + 2 * cp * 4          # double-buffered x row + out row
    tm_cap = max((budget - fixed) // per_row, 128)
    tm = min(int(tm_cap), 2048)                      # bound per-grid-step latency
    tm = max(128, (tm // 128) * 128)                 # MXU-friendly M tile
    tm = min(tm, _round_up(N, 8))                    # never larger than (padded) N
    # TODO(synk): for very large in_ch (C >~ 3-4k) the (C,C) gram scratch alone
    # approaches the v7x VMEM budget; a column-tiled phase 1 would be needed.

    n_pad = _round_up(N, tm)
    if n_pad != N:
        # Zero rows do not perturb gram (x^T x); their outputs are sliced off.
        x = jnp.pad(x, ((0, n_pad - N), (0, 0)))
    n_tiles = n_pad // tm

    # Never below the default scoped limit, never above ~85% of physical VMEM.
    vmem_limit = int(min(budget, max(32 << 20, fixed + per_row * tm + (8 << 20))))

    # ---- phase 1: W1' = (softmax(x^T x, 0) + I) @ W1 ; attn never hits HBM ----
    w1p = pl.pallas_call(
        _gram_fold_kernel,
        out_shape=jax.ShapeDtypeStruct((C, H), jnp.float32),
        grid_spec=pltpu.PrefetchScalarGridSpec(
            num_scalar_prefetch=0,
            grid=(n_tiles,),
            in_specs=[
                pl.BlockSpec((tm, C), lambda i: (i, 0)),   # x row tile (pipelined)
                pl.BlockSpec((C, H), lambda i: (0, 0)),    # W1 (resident)
            ],
            out_specs=pl.BlockSpec((C, H), lambda i: (0, 0)),  # W1' (resident)
            scratch_shapes=[pltpu.VMEM((C, C), jnp.float32)],
        ),
        compiler_params=pltpu.CompilerParams(
            dimension_semantics=("arbitrary",),
            vmem_limit_bytes=vmem_limit),
        cost_estimate=pl.CostEstimate(
            flops=2 * n_pad * C * C + 2 * C * C * H,
            transcendentals=C * C,
            bytes_accessed=n_pad * C * itemsize + C * H * itemsize + C * H * 4,
        ),
    )(x, w1)

    if operand_dtype is not None:
        w1p = w1p.astype(operand_dtype)

    # ---- phase 2: row-tiled relu(x @ W1' + b1) @ W2 + b2, lane-dense logits ---
    w2p = jnp.pad(w2, ((0, 0), (0, cp - num_classes)))       # zero class columns
    b2p = jnp.pad(b2, (0, cp - num_classes)).reshape(1, cp)
    b1_2d = b1.reshape(1, H)

    out = pl.pallas_call(
        _mlp_kernel,
        out_shape=jax.ShapeDtypeStruct((n_pad, cp), jnp.float32),
        grid_spec=pltpu.PrefetchScalarGridSpec(
            num_scalar_prefetch=0,
            grid=(n_tiles,),
            in_specs=[
                pl.BlockSpec((tm, C), lambda i: (i, 0)),    # x row tile (pipelined)
                pl.BlockSpec((C, H), lambda i: (0, 0)),     # W1' (resident)
                pl.BlockSpec((1, H), lambda i: (0, 0)),     # b1 (resident)
                pl.BlockSpec((H, cp), lambda i: (0, 0)),    # W2 padded (resident)
                pl.BlockSpec((1, cp), lambda i: (0, 0)),    # b2 padded (resident)
            ],
            out_specs=pl.BlockSpec((tm, cp), lambda i: (i, 0)),
        ),
        # "parallel" lets the row axis shard across v7x's two TensorCores; if an
        # xprof trace shows only one TC busy, switch to pltpu.CORE_PARALLEL.
        compiler_params=pltpu.CompilerParams(
            dimension_semantics=("parallel",),
            vmem_limit_bytes=vmem_limit),
        cost_estimate=pl.CostEstimate(
            flops=2 * n_pad * (C * H + H * cp),
            transcendentals=0,
            bytes_accessed=(n_pad * C * itemsize + (C * H + H * cp) * itemsize
                            + (H + cp) * 4 + n_pad * cp * 4),
        ),
    )(x, w1p, b1_2d, w2p, b2p)

    return out[:N, :num_classes]


def _linear_init(key, fan_in, fan_out):
    """Deterministic PyTorch-style nn.Linear init: U(-1/sqrt(fan_in), 1/sqrt(fan_in))."""
    kw, kb = jax.random.split(key)
    bound = 1.0 / jnp.sqrt(jnp.float32(fan_in))
    w = jax.random.uniform(kw, (fan_in, fan_out), jnp.float32, -bound, bound)
    b = jax.random.uniform(kb, (fan_out,), jnp.float32, -bound, bound)
    return w, b


def _reference(x, w1, b1, w2, b2):
    xf = x.astype(jnp.float32)
    w1f = w1.astype(jnp.float32)
    w2f = w2.astype(jnp.float32)
    gram = xf.T @ xf
    attn = jax.nn.softmax(gram, axis=0)
    y = xf @ attn + xf
    h = jnp.maximum(y @ w1f + b1, 0.0)
    return h @ w2f + b2


if __name__ == "__main__":
    # Small shapes consistent with the module: x is (N, in_ch).
    N, in_ch = 8, 32
    hidden = 256            # layers_description = (256,)
    num_classes = 10

    key = jax.random.PRNGKey(0)
    kx, k1, k2 = jax.random.split(key, 3)

    x = jax.random.normal(kx, (N, in_ch), jnp.float32)
    w1, b1 = _linear_init(k1, in_ch, hidden)        # classifier Linear(in_ch, 256)
    w2, b2 = _linear_init(k2, hidden, num_classes)  # classifier Linear(256, num_classes)
    # TODO(synk): nn.Dropout(p=0.1) is treated as identity (inference-mode semantics).

    # f32-operand path: check against the pure-f32 reference.  Tolerance covers
    # the EUP approximate reciprocal and the (attn + I) @ W1 reassociation.
    out_f32 = jax.block_until_ready(
        classifier_mlp(x, w1, b1, w2, b2, operand_dtype=None))
    ref_f32 = _reference(x, w1, b1, w2, b2)
    assert out_f32.shape == (N, num_classes)
    assert jnp.allclose(out_f32, ref_f32, atol=1e-2, rtol=1e-2), "f32 mismatch"

    # Default bf16-operand path (MXU fast path on v6e/v7x): compare against a
    # reference fed the same bf16-cast operands (accumulation stays f32).
    out_bf16 = jax.block_until_ready(classifier_mlp(x, w1, b1, w2, b2))
    ref_bf16 = _reference(x.astype(jnp.bfloat16), w1.astype(jnp.bfloat16), b1,
                          w2.astype(jnp.bfloat16), b2)
    assert out_bf16.shape == (N, num_classes)
    assert jnp.allclose(out_bf16, ref_bf16, atol=5e-2, rtol=5e-2), "bf16 mismatch"

    print("KERNEL_OK")
</pallas_src>

<mosaic_0001>
module attributes {stable_mosaic.version = 11 : i64} {
  func.func @_gram_fold_kernel(%arg0: i32, %arg1: memref<8x32xf32, #tpu.memory_space<vmem>>, %arg2: memref<32x256xf32, #tpu.memory_space<vmem>>, %arg3: memref<32x256xf32, #tpu.memory_space<vmem>>, %arg4: memref<32x32xf32, #tpu.memory_space<vmem>>) attributes {dimension_semantics = [#tpu.dimension_semantics<arbitrary>], iteration_bounds = array<i64: 1>, scalar_prefetch = 0 : i64, scratch_operands = 1 : i64, tpu.core_type = #tpu.core_type<tc>, window_params = [{transform_indices = @transform_0, window_bounds = array<i64: 8, 32>}, {pipeline_mode = #tpu.pipeline_mode<synchronous>, transform_indices = @transform_1, window_bounds = array<i64: 32, 256>}, {pipeline_mode = #tpu.pipeline_mode<synchronous>, transform_indices = @transform_2, window_bounds = array<i64: 32, 256>}]} {
    %c0_i32 = arith.constant 0 : i32
    %0 = arith.cmpi eq, %arg0, %c0_i32 : i32
    %1 = arith.extui %0 : i1 to i32
    %c0_i32_0 = arith.constant 0 : i32
    %2 = arith.cmpi ne, %1, %c0_i32_0 : i32
    scf.if %2 {
      %cst_8 = arith.constant 0.000000e+00 : f32
      %11 = vector.broadcast %cst_8 : f32 to vector<32x32xf32>
      %c0_9 = arith.constant 0 : index
      %c0_10 = arith.constant 0 : index
      %12 = vector.load %arg4[%c0_9, %c0_10] : memref<32x32xf32, #tpu.memory_space<vmem>>, vector<32x32xf32>
      tpu.vector_store %arg4[%c0_9, %c0_10], %11 {strides = array<i32>} : memref<32x32xf32, #tpu.memory_space<vmem>>, vector<32x32xf32>,
    } else {
    }
    %c0 = arith.constant 0 : index
    %c0_1 = arith.constant 0 : index
    %3 = vector.load %arg1[%c0, %c0_1] : memref<8x32xf32, #tpu.memory_space<vmem>>, vector<8x32xf32>
    %c0_2 = arith.constant 0 : index
    %c0_3 = arith.constant 0 : index
    %4 = vector.load %arg4[%c0_2, %c0_3] : memref<32x32xf32, #tpu.memory_space<vmem>>, vector<32x32xf32>
    %cst = arith.constant dense<0.000000e+00> : vector<32x32xf32>
    %5 = tpu.matmul %3, %3, %cst {dimension_numbers = #tpu.dot_dimension_numbers<[0], [0], [1], [1], [0, 1, 1, 1], [], []>} : vector<8x32xf32>, vector<8x32xf32>, vector<32x32xf32> -> vector<32x32xf32>
    %6 = arith.addf %4, %5 : vector<32x32xf32>
    %c0_4 = arith.constant 0 : index
    %c0_5 = arith.constant 0 : index
    %7 = vector.load %arg4[%c0_4, %c0_5] : memref<32x32xf32, #tpu.memory_space<vmem>>, vector<32x32xf32>
    tpu.vector_store %arg4[%c0_4, %c0_5], %6 {strides = array<i32>} : memref<32x32xf32, #tpu.memory_space<vmem>>, vector<32x32xf32>,
    %c0_i32_6 = arith.constant 0 : i32
    %8 = arith.cmpi eq, %arg0, %c0_i32_6 : i32
    %9 = arith.extui %8 : i1 to i32
    %c0_i32_7 = arith.constant 0 : i32
    %10 = arith.cmpi ne, %9, %c0_i32_7 : i32
    scf.if %10 {
      %c0_8 = arith.constant 0 : index
      %c0_9 = arith.constant 0 : index
      %11 = vector.load %arg4[%c0_8, %c0_9] : memref<32x32xf32, #tpu.memory_space<vmem>>, vector<32x32xf32>
      %cst_10 = arith.constant dense<0xFF800000> : vector<32xf32>
      %12 = vector.multi_reduction <maximumf>, %11, %cst_10 [0] : vector<32x32xf32> to vector<32xf32>
      %13 = vector.shape_cast %12 : vector<32xf32> to vector<1x32xf32>
      %14 = vector.broadcast %13 : vector<1x32xf32> to vector<32x32xf32>
      %15 = arith.subf %11, %14 : vector<32x32xf32>
      %16 = math.exp %15 : vector<32x32xf32>
      %cst_11 = arith.constant dense<0.000000e+00> : vector<32xf32>
      %17 = vector.multi_reduction <add>, %16, %cst_11 [0] : vector<32x32xf32> to vector<32xf32>
      %18 = vector.shape_cast %17 : vector<32xf32> to vector<1x32xf32>
      %19 = tpu.reciprocal %18 {approx = true} : vector<1x32xf32> -> vector<1x32xf32>
      %20 = vector.broadcast %19 : vector<1x32xf32> to vector<32x32xf32>
      %21 = arith.mulf %16, %20 : vector<32x32xf32>
      %22 = tpu.iota {dimensions = array<i32: 0>} : vector<32x32xi32>
      %23 = tpu.iota {dimensions = array<i32: 1>} : vector<32x32xi32>
      %24 = arith.cmpi eq, %22, %23 : vector<32x32xi32>
      %25 = arith.extui %24 : vector<32x32xi1> to vector<32x32xi32>
      %26 = arith.sitofp %25 : vector<32x32xi32> to vector<32x32xf32>
      %27 = arith.addf %21, %26 : vector<32x32xf32>
      %c0_12 = arith.constant 0 : index
      %c0_13 = arith.constant 0 : index
      %28 = vector.load %arg2[%c0_12, %c0_13] : memref<32x256xf32, #tpu.memory_space<vmem>>, vector<32x256xf32>
      %cst_14 = arith.constant dense<0.000000e+00> : vector<32x256xf32>
      %29 = tpu.matmul %27, %28, %cst_14 {dimension_numbers = #tpu.dot_dimension_numbers<[1], [0], [0], [1], [0, 0, 1, 1], [], []>} : vector<32x32xf32>, vector<32x256xf32>, vector<32x256xf32> -> vector<32x256xf32>
      %c0_15 = arith.constant 0 : index
      %c0_16 = arith.constant 0 : index
      %30 = vector.load %arg3[%c0_15, %c0_16] : memref<32x256xf32, #tpu.memory_space<vmem>>, vector<32x256xf32>
      tpu.vector_store %arg3[%c0_15, %c0_16], %29 {strides = array<i32>} : memref<32x256xf32, #tpu.memory_space<vmem>>, vector<32x256xf32>,
    } else {
    }
    return
  }
  func.func @transform_0(%arg0: i32) -> (i32, i32) {
    %c0_i32 = arith.constant 0 : i32
    %c0_i32_0 = arith.constant 0 : i32
    return %arg0, %c0_i32 : i32, i32
  }
  func.func @transform_1(%arg0: i32) -> (i32, i32) {
    %c0_i32 = arith.constant 0 : i32
    %c0_i32_0 = arith.constant 0 : i32
    %c0_i32_1 = arith.constant 0 : i32
    return %c0_i32, %c0_i32_0 : i32, i32
  }
  func.func @transform_2(%arg0: i32) -> (i32, i32) {
    %c0_i32 = arith.constant 0 : i32
    %c0_i32_0 = arith.constant 0 : i32
    %c0_i32_1 = arith.constant 0 : i32
    return %c0_i32, %c0_i32_0 : i32, i32
  }
}

module attributes {stable_mosaic.version = 11 : i64} {
  func.func @_mlp_kernel(%arg0: i32, %arg1: memref<8x32xf32, #tpu.memory_space<vmem>>, %arg2: memref<32x256xf32, #tpu.memory_space<vmem>>, %arg3: memref<1x256xf32, #tpu.memory_space<vmem>>, %arg4: memref<256x128xf32, #tpu.memory_space<vmem>>, %arg5: memref<1x128xf32, #tpu.memory_space<vmem>>, %arg6: memref<8x128xf32, #tpu.memory_space<vmem>>) attributes {dimension_semantics = [#tpu.dimension_semantics<parallel>], iteration_bounds = array<i64: 1>, scalar_prefetch = 0 : i64, scratch_operands = 0 : i64, tpu.core_type = #tpu.core_type<tc>, window_params = [{transform_indices = @transform_0, window_bounds = array<i64: 8, 32>}, {pipeline_mode = #tpu.pipeline_mode<synchronous>, transform_indices = @transform_1, window_bounds = array<i64: 32, 256>}, {pipeline_mode = #tpu.pipeline_mode<synchronous>, transform_indices = @transform_2, window_bounds = array<i64: 1, 256>}, {pipeline_mode = #tpu.pipeline_mode<synchronous>, transform_indices = @transform_3, window_bounds = array<i64: 256, 128>}, {pipeline_mode = #tpu.pipeline_mode<synchronous>, transform_indices = @transform_4, window_bounds = array<i64: 1, 128>}, {transform_indices = @transform_5, window_bounds = array<i64: 8, 128>}]} {
    %c0 = arith.constant 0 : index
    %c0_0 = arith.constant 0 : index
    %0 = vector.load %arg1[%c0, %c0_0] : memref<8x32xf32, #tpu.memory_space<vmem>>, vector<8x32xf32>
    %c0_1 = arith.constant 0 : index
    %c0_2 = arith.constant 0 : index
    %1 = vector.load %arg2[%c0_1, %c0_2] : memref<32x256xf32, #tpu.memory_space<vmem>>, vector<32x256xf32>
    %cst = arith.constant dense<0.000000e+00> : vector<8x256xf32>
    %2 = tpu.matmul %0, %1, %cst {dimension_numbers = #tpu.dot_dimension_numbers<[1], [0], [0], [1], [0, 0, 1, 1], [], []>} : vector<8x32xf32>, vector<32x256xf32>, vector<8x256xf32> -> vector<8x256xf32>
    %c0_3 = arith.constant 0 : index
    %c0_4 = arith.constant 0 : index
    %3 = vector.load %arg3[%c0_3, %c0_4] : memref<1x256xf32, #tpu.memory_space<vmem>>, vector<1x256xf32>
    %4 = vector.broadcast %3 : vector<1x256xf32> to vector<8x256xf32>
    %5 = arith.addf %2, %4 : vector<8x256xf32>
    %cst_5 = arith.constant 0.000000e+00 : f32
    %6 = vector.broadcast %cst_5 : f32 to vector<8x256xf32>
    %7 = arith.maximumf %5, %6 : vector<8x256xf32>
    %c0_6 = arith.constant 0 : index
    %c0_7 = arith.constant 0 : index
    %8 = vector.load %arg4[%c0_6, %c0_7] : memref<256x128xf32, #tpu.memory_space<vmem>>, vector<256x128xf32>
    %cst_8 = arith.constant dense<0.000000e+00> : vector<8x128xf32>
    %9 = tpu.matmul %7, %8, %cst_8 {dimension_numbers = #tpu.dot_dimension_numbers<[1], [0], [0], [1], [0, 0, 1, 1], [], []>} : vector<8x256xf32>, vector<256x128xf32>, vector<8x128xf32> -> vector<8x128xf32>
    %c0_9 = arith.constant 0 : index
    %c0_10 = arith.constant 0 : index
    %10 = vector.load %arg5[%c0_9, %c0_10] : memref<1x128xf32, #tpu.memory_space<vmem>>, vector<1x128xf32>
    %11 = vector.broadcast %10 : vector<1x128xf32> to vector<8x128xf32>
    %12 = arith.addf %9, %11 : vector<8x128xf32>
    %c0_11 = arith.constant 0 : index
    %c0_12 = arith.constant 0 : index
    %13 = vector.load %arg6[%c0_11, %c0_12] : memref<8x128xf32, #tpu.memory_space<vmem>>, vector<8x128xf32>
    tpu.vector_store %arg6[%c0_11, %c0_12], %12 {strides = array<i32>} : memref<8x128xf32, #tpu.memory_space<vmem>>, vector<8x128xf32>,
    return
  }
  func.func @transform_0(%arg0: i32) -> (i32, i32) {
    %c0_i32 = arith.constant 0 : i32
    %c0_i32_0 = arith.constant 0 : i32
    return %arg0, %c0_i32 : i32, i32
  }
  func.func @transform_1(%arg0: i32) -> (i32, i32) {
    %c0_i32 = arith.constant 0 : i32
    %c0_i32_0 = arith.constant 0 : i32
    %c0_i32_1 = arith.constant 0 : i32
    return %c0_i32, %c0_i32_0 : i32, i32
  }
  func.func @transform_2(%arg0: i32) -> (i32, i32) {
    %c0_i32 = arith.constant 0 : i32
    %c0_i32_0 = arith.constant 0 : i32
    %c0_i32_1 = arith.constant 0 : i32
    return %c0_i32, %c0_i32_0 : i32, i32
  }
  func.func @transform_3(%arg0: i32) -> (i32, i32) {
    %c0_i32 = arith.constant 0 : i32
    %c0_i32_0 = arith.constant 0 : i32
    %c0_i32_1 = arith.constant 0 : i32
    return %c0_i32, %c0_i32_0 : i32, i32
  }
  func.func @transform_4(%arg0: i32) -> (i32, i32) {
    %c0_i32 = arith.constant 0 : i32
    %c0_i32_0 = arith.constant 0 : i32
    %c0_i32_1 = arith.constant 0 : i32
    return %c0_i32, %c0_i32_0 : i32, i32
  }
  func.func @transform_5(%arg0: i32) -> (i32, i32) {
    %c0_i32 = arith.constant 0 : i32
    %c0_i32_0 = arith.constant 0 : i32
    return %arg0, %c0_i32 : i32, i32
  }
}

</mosaic_0001>

<llo_original>
// kernel: classifier_mlp.3
$region0: #{classifier_mlp.3}
  #allocation0 [shape = 'u32[]', space=smem, size = 0x4, offset = 0x4, fixed_abs, tag = 'smem constant byte address 0x4 - core index']
  #allocation1 [shape = 'u32[144,128]{1,0:T(1,128)}', space=vmem, size = 0x12000, scoped, tag = 'internal scratch']
  %s0 = inlined_call_operand.vmem [shape: f32[8,32], index: 0, kind: input, shape index: {}]
  %s1 = inlined_call_operand.vmem [shape: f32[32,256], index: 1, kind: input, shape index: {}]
  %s2 = inlined_call_operand.vmem [shape: f32[1,256], index: 2, kind: input, shape index: {}]
  %s3 = inlined_call_operand.vmem [shape: f32[256,128], index: 3, kind: input, shape index: {}]
  %s4 = inlined_call_operand.vmem [shape: f32[1,128], index: 4, kind: input, shape index: {}]
  %s5 = inlined_call_operand.hbm [shape: f32[8,128], index: 5, kind: output, shape index: {}]
  %s6 = sld [smem:[#allocation0]]
  $region30: #{classifier_mlp.3} parent=0
    _
  %s8 = ssub.s32 1, %s6
  %s9 = scalar_select 0, %s8, %s6
  $region1: #{classifier_mlp.3} parent=0
    #allocation2 [shape = 'u8[4096]{0}', space=vmem, size = 0x1000, scoped, tag = 'output window, operand 0, single buffered']
    #allocation3 [shape = 's32[1]{0}', space=sflag, size = 0x4, scoped, tag = 'scoped memory for classifier_mlp.3']
    %10 = vsyncpa [#allocation3], 0
    // Predicated region
    $region2: #{classifier_mlp.3} parent=1 // pred_check
      _
    $region3: #{classifier_mlp.3} parent=1 // pred_check_branch
      %12 = sbr.rel (0) target = $region5
    $region4: #{classifier_mlp.3} parent=1 // pred_region
      _
    $region5: #{classifier_mlp.3} parent=1 // pred_fallthru
      _
    // Predicated region
    $region6: #{classifier_mlp.3} parent=1 // pred_check
      _
    $region7: #{classifier_mlp.3} parent=1 // pred_check_branch
      %14 = sbr.rel (0) target = $region9
    $region8: #{classifier_mlp.3} parent=1 // pred_region
      _
    $region9: #{classifier_mlp.3} parent=1 // pred_fallthru
      _
    // Predicated region
    $region10: #{classifier_mlp.3} parent=1 // pred_check
      _
    $region11: #{classifier_mlp.3} parent=1 // pred_check_branch
      %16 = sbr.rel (0) target = $region13
    $region12: #{classifier_mlp.3} parent=1 // pred_region
      _
    $region13: #{classifier_mlp.3} parent=1 // pred_fallthru
      _
    // Predicated region
    $region14: #{classifier_mlp.3} parent=1 // pred_check
      _
    $region15: #{classifier_mlp.3} parent=1 // pred_check_branch
      %18 = sbr.rel (0) target = $region17
    $region16: #{classifier_mlp.3} parent=1 // pred_region
      _
    $region17: #{classifier_mlp.3} parent=1 // pred_fallthru
      _
    // Predicated region
    $region18: #{classifier_mlp.3} parent=1 // pred_check
      _
    $region19: #{classifier_mlp.3} parent=1 // pred_check_branch
      %20 = sbr.rel (0) target = $region21
    $region20: #{classifier_mlp.3} parent=1 // pred_region
      _
    $region21: #{classifier_mlp.3} parent=1 // pred_fallthru
      _
    %v21 = vld [vmem:[%s0] sm:$0xff]
    %v22 = vld [vmem:[%s1] sm:$0xff]
    %v23 = vld [vmem:[%s1 + $0x8] sm:$0xff]
    %v24 = vld [vmem:[%s1 + $0x10] sm:$0xff]
    %v25 = vld [vmem:[%s1 + $0x18] sm:$0xff]
    %v26 = vld [vmem:[%s1 + $0x20] sm:$0xff]
    %v27 = vld [vmem:[%s1 + $0x28] sm:$0xff]
    %v28 = vld [vmem:[%s1 + $0x30] sm:$0xff]
    %v29 = vld [vmem:[%s1 + $0x38] sm:$0xff]
    %v30 = vld [vmem:[%s2] sm:$0x3]
    %v32 = vlaneseq
    %v33 = vshrl.u32 %v32, 7
    %v34 = vsub.s32 0, %v33
    %v35 = vrot.slane %v30, %v34
    %v36 = vlaneseq
    %v37 = vshrl.u32 %v36, 7
    %v38 = vsub.s32 1, %v37
    %v39 = vrot.slane %v30, %v38
    %vm42 = vcmask 261120
    %v44 = vsel %vm42, %v21, 0
    %46 = vmatprep.subr.mxu0 0.0
    %47 = vmatpush1.msra.mxu0 0.0
    %48 = vmatprep.subr.mxu0 0.0
    %49 = vmatpush1.msra.mxu0 0.0
    %50 = vmatprep.subr.mxu0 0.0
    %51 = vmatpush1.msra.mxu0 0.0
    %52 = vmatprep.subr.mxu0 0.0
    %53 = vmatpush1.msra.mxu0 0.0
    %54 = vmatprep.subr.mxu0 0.0
    %55 = vmatpush1.msra.mxu0 0.0
    %56 = vmatprep.subr.mxu0 0.0
    %57 = vmatpush1.msra.mxu0 0.0
    %58 = vmatprep.subr.mxu0 0.0
    %59 = vmatpush1.msra.mxu0 0.0
    %60 = vmatprep.subr.mxu0 0.0
    %61 = vmatpush1.msra.mxu0 0.0
    %62 = vmatprep.subr.mxu0 0.0
    %63 = vmatpush1.msra.mxu0 0.0
    %64 = vmatprep.subr.mxu0 0.0
    %65 = vmatpush1.msra.mxu0 0.0
    %66 = vmatprep.subr.mxu0 0.0
    %67 = vmatpush1.msra.mxu0 0.0
    %68 = vmatprep.subr.mxu0 0.0
    %69 = vmatpush1.msra.mxu0 0.0
    %70 = vmatprep.subr.mxu0 %v29
    %71 = vmatpush1.msra.mxu0 %v28
    %72 = vmatprep.subr.mxu0 %v27
    %73 = vmatpush1.msra.mxu0 %v26
    %74 = vmatprep.subr.mxu0 %v25
    %75 = vmatpush1.msra.mxu0 %v24
    %76 = vmatprep.subr.mxu0 %v23
    %77 = vmatpush1.msra.mxu0 %v22
    %78 = vmatprep.subr.mxu0 0.0
    %79 = vmatpush2.msra.mxu0 0.0
    %80 = vmatprep.subr.mxu0 0.0
    %81 = vmatpush2.msra.mxu0 0.0
    %82 = vmatprep.subr.mxu0 0.0
    %83 = vmatpush2.msra.mxu0 0.0
    %84 = vmatprep.subr.mxu0 0.0
    %85 = vmatpush2.msra.mxu0 0.0
    %86 = vmatprep.subr.mxu0 0.0
    %87 = vmatpush2.msra.mxu0 0.0
    %88 = vmatprep.subr.mxu0 0.0
    %89 = vmatpush2.msra.mxu0 0.0
    %90 = vmatprep.subr.mxu0 0.0
    %91 = vmatpush2.msra.mxu0 0.0
    %92 = vmatprep.subr.mxu0 0.0
    %93 = vmatpush2.msra.mxu0 0.0
    %94 = vmatprep.subr.mxu0 0.0
    %95 = vmatpush2.msra.mxu0 0.0
    %96 = vmatprep.subr.mxu0 0.0
    %97 = vmatpush2.msra.mxu0 0.0
    %98 = vmatprep.subr.mxu0 0.0
    %99 = vmatpush2.msra.mxu0 0.0
    %100 = vmatprep.subr.mxu0 0.0
    %101 = vmatpush2.msra.mxu0 0.0
    %102 = vmatprep.subr.mxu0 0.0
    %103 = vmatpush2.msra.mxu0 0.0
    %104 = vmatprep.subr.mxu0 0.0
    %105 = vmatpush2.msra.mxu0 0.0
    %106 = vmatprep.subr.mxu0 0.0
    %107 = vmatpush2.msra.mxu0 0.0
    %108 = vmatprep.subr.mxu0 0.0
    %109 = vmatpush2.msra.mxu0 0.0
    %110 = vmatprep.mubr.f32.mxu0 0.0
    %111 = vmatmul.mubr.f32.gmra.mxu0 %v44
    %v112 = vpop.f32.mrf.mxu0
    %v113 = vadd.f32 %v35, %v112
    %v114 = vpop.f32.mrf.mxu0
    %v115 = vadd.f32 %v39, %v114
    %116 = vdwg.mxu0
    %v117 = vmax.f32 %v113, 0.0
    %v118 = vmax.f32 %v115, 0.0
    %v119 = vld [vmem:[%s3] sm:$0xff]
    %v120 = vld [vmem:[%s3 + $0x8] sm:$0xff]
    %v121 = vld [vmem:[%s3 + $0x10] sm:$0xff]
    %v122 = vld [vmem:[%s3 + $0x18] sm:$0xff]
    %v123 = vld [vmem:[%s3 + $0x20] sm:$0xff]
    %v124 = vld [vmem:[%s3 + $0x28] sm:$0xff]
    %v125 = vld [vmem:[%s3 + $0x30] sm:$0xff]
    %v126 = vld [vmem:[%s3 + $0x38] sm:$0xff]
    %v127 = vld [vmem:[%s3 + $0x40] sm:$0xff]
    %v128 = vld [vmem:[%s3 + $0x48] sm:$0xff]
    %v129 = vld [vmem:[%s3 + $0x50] sm:$0xff]
    %v130 = vld [vmem:[%s3 + $0x58] sm:$0xff]
    %v131 = vld [vmem:[%s3 + $0x60] sm:$0xff]
    %v132 = vld [vmem:[%s3 + $0x68] sm:$0xff]
    %v133 = vld [vmem:[%s3 + $0x70] sm:$0xff]
    %v134 = vld [vmem:[%s3 + $0x78] sm:$0xff]
    %v135 = vld [vmem:[%s3 + $0x80] sm:$0xff]
    %v136 = vld [vmem:[%s3 + $0x88] sm:$0xff]
    %v137 = vld [vmem:[%s3 + $0x90] sm:$0xff]
    %v138 = vld [vmem:[%s3 + $0x98] sm:$0xff]
    %v139 = vld [vmem:[%s3 + $0xa0] sm:$0xff]
    %v140 = vld [vmem:[%s3 + $0xa8] sm:$0xff]
    %v141 = vld [vmem:[%s3 + $0xb0] sm:$0xff]
    %v142 = vld [vmem:[%s3 + $0xb8] sm:$0xff]
    %v143 = vld [vmem:[%s3 + $0xc0] sm:$0xff]
    %v144 = vld [vmem:[%s3 + $0xc8] sm:$0xff]
    %v145 = vld [vmem:[%s3 + $0xd0] sm:$0xff]
    %v146 = vld [vmem:[%s3 + $0xd8] sm:$0xff]
    %v147 = vld [vmem:[%s3 + $0xe0] sm:$0xff]
    %v148 = vld [vmem:[%s3 + $0xe8] sm:$0xff]
    %v149 = vld [vmem:[%s3 + $0xf0] sm:$0xff]
    %v150 = vld [vmem:[%s3 + $0xf8] sm:$0xff]
    %v151 = vld [vmem:[%s4] sm:$0x1]
    %v153 = vlaneseq
    %v154 = vshrl.u32 %v153, 7
    %v155 = vsub.s32 0, %v154
    %v156 = vrot.slane %v151, %v155
    %158 = vmatprep.subr.mxu0 0.0
    %159 = vmatpush1.msra.mxu0 %v134
    %160 = vmatprep.subr.mxu0 0.0
    %161 = vmatpush1.msra.mxu0 %v133
    %162 = vmatprep.subr.mxu0 0.0
    %163 = vmatpush1.msra.mxu0 %v132
    %164 = vmatprep.subr.mxu0 0.0
    %165 = vmatpush1.msra.mxu0 %v131
    %166 = vmatprep.subr.mxu0 0.0
    %167 = vmatpush1.msra.mxu0 %v130
    %168 = vmatprep.subr.mxu0 0.0
    %169 = vmatpush1.msra.mxu0 %v129
    %170 = vmatprep.subr.mxu0 0.0
    %171 = vmatpush1.msra.mxu0 %v128
    %172 = vmatprep.subr.mxu0 0.0
    %173 = vmatpush1.msra.mxu0 %v127
    %174 = vmatprep.subr.mxu0 0.0
    %175 = vmatpush1.msra.mxu0 %v126
    %176 = vmatprep.subr.mxu0 0.0
    %177 = vmatpush1.msra.mxu0 %v125
    %178 = vmatprep.subr.mxu0 0.0
    %179 = vmatpush1.msra.mxu0 %v124
    %180 = vmatprep.subr.mxu0 0.0
    %181 = vmatpush1.msra.mxu0 %v123
    %182 = vmatprep.subr.mxu0 0.0
    %183 = vmatpush1.msra.mxu0 %v122
    %184 = vmatprep.subr.mxu0 0.0
    %185 = vmatpush1.msra.mxu0 %v121
    %186 = vmatprep.subr.mxu0 0.0
    %187 = vmatpush1.msra.mxu0 %v120
    %188 = vmatprep.subr.mxu0 0.0
    %189 = vmatpush1.msra.mxu0 %v119
    %190 = vmatprep.subr.mxu0 0.0
    %191 = vmatpush2.msra.mxu0 %v150
    %192 = vmatprep.subr.mxu0 0.0
    %193 = vmatpush2.msra.mxu0 %v149
    %194 = vmatprep.subr.mxu0 0.0
    %195 = vmatpush2.msra.mxu0 %v148
    %196 = vmatprep.subr.mxu0 0.0
    %197 = vmatpush2.msra.mxu0 %v147
    %198 = vmatprep.subr.mxu0 0.0
    %199 = vmatpush2.msra.mxu0 %v146
    %200 = vmatprep.subr.mxu0 0.0
    %201 = vmatpush2.msra.mxu0 %v145
    %202 = vmatprep.subr.mxu0 0.0
    %203 = vmatpush2.msra.mxu0 %v144
    %204 = vmatprep.subr.mxu0 0.0
    %205 = vmatpush2.msra.mxu0 %v143
    %206 = vmatprep.subr.mxu0 0.0
    %207 = vmatpush2.msra.mxu0 %v142
    %208 = vmatprep.subr.mxu0 0.0
    %209 = vmatpush2.msra.mxu0 %v141
    %210 = vmatprep.subr.mxu0 0.0
    %211 = vmatpush2.msra.mxu0 %v140
    %212 = vmatprep.subr.mxu0 0.0
    %213 = vmatpush2.msra.mxu0 %v139
    %214 = vmatprep.subr.mxu0 0.0
    %215 = vmatpush2.msra.mxu0 %v138
    %216 = vmatprep.subr.mxu0 0.0
    %217 = vmatpush2.msra.mxu0 %v137
    %218 = vmatprep.subr.mxu0 0.0
    %219 = vmatpush2.msra.mxu0 %v136
    %220 = vmatprep.subr.mxu0 0.0
    %221 = vmatpush2.msra.mxu0 %v135
    %222 = vmatprep.mubr.f32.mxu0 %v118
    %223 = vmatmul.mubr.f32.gmra.mxu0 %v117
    %v224 = vpop.f32.mrf.mxu0
    %v225 = vadd.f32 %v156, %v224
    %v226 = vpop.f32.mrf.mxu0
    %227 = vdwg.mxu0
    %228 = vst [vmem:[#allocation2] sm:$0xff] %v225
    // Predicated region
    $region22: #{classifier_mlp.3} parent=1 // pred_check
      _
    $region23: #{classifier_mlp.3} parent=1 // pred_check_branch
      %230 = sbr.rel (0) target = $region25
    $region24: #{classifier_mlp.3} parent=1 // pred_region
      %s232 = ssub.s32 128, 128
      %233 = vsyncadd [#allocation3], %s232
      %s235 = sshll.u32 [#allocation2], 4
      %s236 = int_to_ptr.vmem [resolvable:$true] %s235
      %238 = dma.vmem_to_hbm [thread:$0]  %s236, 128, %s5, [#allocation3]
    $region25: #{classifier_mlp.3} parent=1 // pred_fallthru
      _
    // Predicated region
    $region26: #{classifier_mlp.3} parent=1 // pred_check
      _
    $region27: #{classifier_mlp.3} parent=1 // pred_check_branch
      %240 = sbr.rel (0) target = $region29
    $region28: #{classifier_mlp.3} parent=1 // pred_region
      %241 = dma.done [#allocation3], 128
    $region29: #{classifier_mlp.3} parent=1 // pred_fallthru
      _
    %242 = vsyncpa [#allocation3], 1

// kernel: classifier_mlp.2
$region0: #{classifier_mlp.2}
  #allocation0 [shape = 'u32[]', space=smem, size = 0x4, offset = 0x4, fixed_abs, tag = 'smem constant byte address 0x4 - core index']
  #allocation1 [shape = 'u32[144,128]{1,0:T(1,128)}', space=vmem, size = 0x12000, scoped, tag = 'internal scratch']
  #allocation2 [shape = 'f32[32,32]{1,0:T(8,128)}', space=vmem, size = 0x4000, scoped, tag = 'scratch operand']
  %s0 = inlined_call_operand.vmem [shape: f32[8,32], index: 0, kind: input, shape index: {}]
  %s1 = inlined_call_operand.vmem [shape: f32[32,256], index: 1, kind: input, shape index: {}]
  %s2 = inlined_call_operand.vmem [shape: f32[32,256], index: 2, kind: output, shape index: {}]
  %s3 = sld [smem:[#allocation0]]
  $region26: #{classifier_mlp.2} parent=0
    _
  %s5 = ssub.s32 1, %s3
  %s6 = scalar_select 0, %s5, %s3
  // Predicated region
  $region2: #{classifier_mlp.2} parent=0 // pred_check
    _
  $region3: #{classifier_mlp.2} parent=0 // pred_check_branch
    %8 = sbr.rel (0) target = $region5
  $region4: #{classifier_mlp.2} parent=0 // pred_region
    _
  $region5: #{classifier_mlp.2} parent=0 // pred_fallthru
    _
  // Predicated region
  $region6: #{classifier_mlp.2} parent=0 // pred_check
    _
  $region7: #{classifier_mlp.2} parent=0 // pred_check_branch
    %10 = sbr.rel (0) target = $region9
  $region8: #{classifier_mlp.2} parent=0 // pred_region
    _
  $region9: #{classifier_mlp.2} parent=0 // pred_fallthru
    _
  %p11 = scmp.eq.s32.totalorder 0, 0
  // Predicated region
  $region10: #{classifier_mlp.2} parent=0 // pred_check
    %p12 = pneg %p11
  $region11: #{classifier_mlp.2} parent=0 // pred_check_branch
    %14 = sbr.rel (%p12) target = $region13
  $region12: #{classifier_mlp.2} parent=0 // pred_region
    %vm15 = vcmask 261120
    %16 = vst.msk [vmem:[#allocation2] sm:$0xff] %vm15, 0.0
    %17 = vst.msk [vmem:[#allocation2 + $0x8] sm:$0xff] %vm15, 0.0
    %18 = vst.msk [vmem:[#allocation2 + $0x10] sm:$0xff] %vm15, 0.0
    %19 = vst.msk [vmem:[#allocation2 + $0x18] sm:$0xff] %vm15, 0.0
  $region13: #{classifier_mlp.2} parent=0 // pred_fallthru
    _
  %v20 = vld [vmem:[%s0] sm:$0xff]
  %v21 = vld [vmem:[#allocation2] sm:$0xff]
  %v22 = vld [vmem:[#allocation2 + $0x8] sm:$0xff]
  %v23 = vld [vmem:[#allocation2 + $0x10] sm:$0xff]
  %v24 = vld [vmem:[#allocation2 + $0x18] sm:$0xff]
  %25 = vxpose.xlu0.b32.start [1/16] %v20, 128
  %26 = vxpose.xlu0.b32.cont [2/16] 0.0, 128
  %27 = vxpose.xlu0.b32.cont [3/16] 0.0, 128
  %28 = vxpose.xlu0.b32.cont [4/16] 0.0, 128
  %29 = vxpose.xlu0.b32.cont [5/16] 0.0, 128
  %30 = vxpose.xlu0.b32.cont [6/16] 0.0, 128
  %31 = vxpose.xlu0.b32.cont [7/16] 0.0, 128
  %32 = vxpose.xlu0.b32.cont [8/16] 0.0, 128
  %33 = vxpose.xlu0.b32.cont [9/16] 0.0, 128
  %34 = vxpose.xlu0.b32.cont [10/16] 0.0, 128
  %35 = vxpose.xlu0.b32.cont [11/16] 0.0, 128
  %36 = vxpose.xlu0.b32.cont [12/16] 0.0, 128
  %37 = vxpose.xlu0.b32.cont [13/16] 0.0, 128
  %38 = vxpose.xlu0.b32.cont [14/16] 0.0, 128
  %39 = vxpose.xlu0.b32.cont [15/16] 0.0, 128
  %40 = vxpose.xlu0.b32.end [16/16] 0.0, 128
  %v41 = vpop.trf.xlu0
  %v42 = vpop.trf.xlu0
  %v43 = vpop.trf.xlu0
  %v44 = vpop.trf.xlu0
  %v45 = vpop.trf.xlu0
  %v46 = vpop.trf.xlu0
  %v47 = vpop.trf.xlu0
  %v48 = vpop.trf.xlu0
  %v49 = vpop.trf.xlu0
  %v50 = vpop.trf.xlu0
  %v51 = vpop.trf.xlu0
  %v52 = vpop.trf.xlu0
  %v53 = vpop.trf.xlu0
  %v54 = vpop.trf.xlu0
  %v55 = vpop.trf.xlu0
  %v56 = vpop.trf.xlu0
  %vm57 = vcmask 64512
  %v59 = vsel %vm57, %v41, 0
  %v62 = vsel %vm57, %v42, 0
  %v65 = vsel %vm57, %v43, 0
  %v68 = vsel %vm57, %v44, 0
  %70 = vmatprep.subr.mxu0 0.0
  %71 = vmatpush1.msra.mxu0 0.0
  %72 = vmatprep.subr.mxu0 0.0
  %73 = vmatpush1.msra.mxu0 0.0
  %74 = vmatprep.subr.mxu0 0.0
  %75 = vmatpush1.msra.mxu0 0.0
  %76 = vmatprep.subr.mxu0 0.0
  %77 = vmatpush1.msra.mxu0 0.0
  %78 = vmatprep.subr.mxu0 0.0
  %79 = vmatpush1.msra.mxu0 0.0
  %80 = vmatprep.subr.mxu0 0.0
  %81 = vmatpush1.msra.mxu0 0.0
  %82 = vmatprep.subr.mxu0 0.0
  %83 = vmatpush1.msra.mxu0 0.0
  %84 = vmatprep.subr.mxu0 0.0
  %85 = vmatpush1.msra.mxu0 0.0
  %86 = vmatprep.subr.mxu0 0.0
  %87 = vmatpush1.msra.mxu0 0.0
  %88 = vmatprep.subr.mxu0 0.0
  %89 = vmatpush1.msra.mxu0 0.0
  %90 = vmatprep.subr.mxu0 0.0
  %91 = vmatpush1.msra.mxu0 0.0
  %92 = vmatprep.subr.mxu0 0.0
  %93 = vmatpush1.msra.mxu0 0.0
  %94 = vmatprep.subr.mxu0 0.0
  %95 = vmatpush1.msra.mxu0 0.0
  %96 = vmatprep.subr.mxu0 0.0
  %97 = vmatpush1.msra.mxu0 0.0
  %98 = vmatprep.subr.mxu0 0.0
  %99 = vmatpush1.msra.mxu0 0.0
  %100 = vmatprep.subr.mxu0 0.0
  %101 = vmatpush1.msra.mxu0 %v20
  %102 = vmatprep.subr.mxu0 0.0
  %103 = vmatpush2.msra.mxu0 0.0
  %104 = vmatprep.subr.mxu0 0.0
  %105 = vmatpush2.msra.mxu0 0.0
  %106 = vmatprep.subr.mxu0 0.0
  %107 = vmatpush2.msra.mxu0 0.0
  %108 = vmatprep.subr.mxu0 0.0
  %109 = vmatpush2.msra.mxu0 0.0
  %110 = vmatprep.subr.mxu0 0.0
  %111 = vmatpush2.msra.mxu0 0.0
  %112 = vmatprep.subr.mxu0 0.0
  %113 = vmatpush2.msra.mxu0 0.0
  %114 = vmatprep.subr.mxu0 0.0
  %115 = vmatpush2.msra.mxu0 0.0
  %116 = vmatprep.subr.mxu0 0.0
  %117 = vmatpush2.msra.mxu0 0.0
  %118 = vmatprep.subr.mxu0 0.0
  %119 = vmatpush2.msra.mxu0 0.0
  %120 = vmatprep.subr.mxu0 0.0
  %121 = vmatpush2.msra.mxu0 0.0
  %122 = vmatprep.subr.mxu0 0.0
  %123 = vmatpush2.msra.mxu0 0.0
  %124 = vmatprep.subr.mxu0 0.0
  %125 = vmatpush2.msra.mxu0 0.0
  %126 = vmatprep.subr.mxu0 0.0
  %127 = vmatpush2.msra.mxu0 0.0
  %128 = vmatprep.subr.mxu0 0.0
  %129 = vmatpush2.msra.mxu0 0.0
  %130 = vmatprep.subr.mxu0 0.0
  %131 = vmatpush2.msra.mxu0 0.0
  %132 = vmatprep.subr.mxu0 0.0
  %133 = vmatpush2.msra.mxu0 0.0
  %134 = vmatprep.mubr.f32.mxu0 0.0
  %135 = vmatmul.mubr.f32.gmra.mxu0 %v59
  %v136 = vpop.f32.mrf.mxu0
  %v137 = vadd.f32 0.0, %v136
  %v138 = vpop.f32.mrf.mxu0
  %139 = vmatprep.mubr.f32.mxu0 0.0
  %140 = vmatmul.mubr.f32.gmra.mxu0 %v62
  %v141 = vpop.f32.mrf.mxu0
  %v142 = vadd.f32 0.0, %v141
  %v143 = vpop.f32.mrf.mxu0
  %144 = vmatprep.mubr.f32.mxu0 0.0
  %145 = vmatmul.mubr.f32.gmra.mxu0 %v65
  %v146 = vpop.f32.mrf.mxu0
  %v147 = vadd.f32 0.0, %v146
  %v148 = vpop.f32.mrf.mxu0
  %149 = vmatprep.mubr.f32.mxu0 0.0
  %150 = vmatmul.mubr.f32.gmra.mxu0 %v68
  %v151 = vpop.f32.mrf.mxu0
  %v152 = vadd.f32 0.0, %v151
  %v153 = vpop.f32.mrf.mxu0
  %154 = vdwg.mxu0
  %v155 = vadd.f32 %v21, %v137
  %v156 = vadd.f32 %v22, %v142
  %v157 = vadd.f32 %v23, %v147
  %v158 = vadd.f32 %v24, %v152
  %vm159 = vcmask 261120
  %160 = vst.msk [vmem:[#allocation2] sm:$0xff] %vm159, %v155
  %161 = vst.msk [vmem:[#allocation2 + $0x8] sm:$0xff] %vm159, %v156
  %162 = vst.msk [vmem:[#allocation2 + $0x10] sm:$0xff] %vm159, %v157
  %163 = vst.msk [vmem:[#allocation2 + $0x18] sm:$0xff] %vm159, %v158
  // Predicated region
  $region14: #{classifier_mlp.2} parent=0 // pred_check
    %p164 = pneg %p11
  $region15: #{classifier_mlp.2} parent=0 // pred_check_branch
    %166 = sbr.rel (%p164) target = $region17
  $region16: #{classifier_mlp.2} parent=0 // pred_region
    %v167 = vld [vmem:[#allocation2] sm:$0xff]
    %v168 = vld [vmem:[#allocation2 + $0x8] sm:$0xff]
    %v169 = vld [vmem:[#allocation2 + $0x10] sm:$0xff]
    %v170 = vld [vmem:[#allocation2 + $0x18] sm:$0xff]
    %v171 = vsel %vm159, %v167, -inf
    %v172 = vsel %vm159, %v168, -inf
    %v173 = vsel %vm159, %v169, -inf
    %v174 = vsel %vm159, %v170, -inf
    %v175 = vmax.f32 %v171, %v172
    %v176 = vmax.f32 %v173, %v174
    %v177 = vmax.f32 %v175, %v176
    %v178 = vrot.slane %v177, 4
    %v179 = vmax.f32 %v177, %v178
    %v180 = vrot.slane %v179, 2
    %v181 = vmax.f32 %v179, %v180
    %v182 = vrot.slane %v181, 1
    %v183 = vmax.f32 %v181, %v182
    %v184 = vsub.f32 %v167, %v183
    %v185 = vsub.f32 %v168, %v183
    %v186 = vsub.f32 %v169, %v183
    %v187 = vsub.f32 %v170, %v183
    %v188 = vmul.f32 %v184, 1.442695
    %v189 = vpow.pop %v188
    %v190 = vmul.f32 %v185, 1.442695
    %v191 = vpow.pop %v190
    %v192 = vmul.f32 %v186, 1.442695
    %v193 = vpow.pop %v192
    %v194 = vmul.f32 %v187, 1.442695
    %v195 = vpow.pop %v194
    %v196 = vsel %vm159, %v189, 0.0
    %v197 = vsel %vm159, %v191, 0.0
    %v198 = vadd.f32 %v196, %v197
    %v199 = vsel %vm159, %v193, 0.0
    %v200 = vadd.f32 %v198, %v199
    %v201 = vsel %vm159, %v195, 0.0
    %v202 = vadd.f32 %v200, %v201
    %v203 = vrot.slane %v202, 4
    %v204 = vadd.f32 %v202, %v203
    %v205 = vrot.slane %v204, 2
    %v206 = vadd.f32 %v204, %v205
    %v207 = vrot.slane %v206, 1
    %v208 = vadd.f32 %v206, %v207
    %v209 = vrcp.pop %v208
    %v210 = vmul.f32 %v189, %v209
    %v211 = vmul.f32 %v191, %v209
    %v212 = vmul.f32 %v193, %v209
    %v213 = vmul.f32 %v195, %v209
    %v214 = vlaneseq
    %v215 = vshrl.u32 %v214, 7
    %v216 = vadd.s32 %v215, 8
    %v217 = vadd.s32 %v215, 16
    %v218 = vadd.s32 %v215, 24
    %v219 = vlaneseq
    %v220 = vand.u32 %v219, 127
    %vm221 = vcmp.eq.s32.totalorder %v215, %v220
    %vm222 = vcmp.eq.s32.totalorder %v216, %v220
    %vm223 = vcmp.eq.s32.totalorder %v217, %v220
    %vm224 = vcmp.eq.s32.totalorder %v218, %v220
    %v225 = vsel %vm221, 1, 0
    %v226 = vsel %vm222, 1, 0
    %v227 = vsel %vm223, 1, 0
    %v228 = vsel %vm224, 1, 0
    %v229 = vcvt.s32.f32 %v225
    %v230 = vcvt.s32.f32 %v226
    %v231 = vcvt.s32.f32 %v227
    %v232 = vcvt.s32.f32 %v228
    %v233 = vadd.f32 %v210, %v229
    %v234 = vadd.f32 %v211, %v230
    %v235 = vadd.f32 %v212, %v231
    %v236 = vadd.f32 %v213, %v232
    %v237 = vld [vmem:[%s1] sm:$0xff]
    %v238 = vld [vmem:[%s1 + $0x8] sm:$0xff]
    %v239 = vld [vmem:[%s1 + $0x10] sm:$0xff]
    %v240 = vld [vmem:[%s1 + $0x18] sm:$0xff]
    %v241 = vld [vmem:[%s1 + $0x20] sm:$0xff]
    %v242 = vld [vmem:[%s1 + $0x28] sm:$0xff]
    %v243 = vld [vmem:[%s1 + $0x30] sm:$0xff]
    %v244 = vld [vmem:[%s1 + $0x38] sm:$0xff]
    %v246 = vsel %vm159, %v233, 0
    %v249 = vsel %vm159, %v234, 0
    %v252 = vsel %vm159, %v235, 0
    %v255 = vsel %vm159, %v236, 0
    %257 = vmatprep.subr.mxu0 0.0
    %258 = vmatpush1.msra.mxu0 0.0
    %259 = vmatprep.subr.mxu0 0.0
    %260 = vmatpush1.msra.mxu0 0.0
    %261 = vmatprep.subr.mxu0 0.0
    %262 = vmatpush1.msra.mxu0 0.0
    %263 = vmatprep.subr.mxu0 0.0
    %264 = vmatpush1.msra.mxu0 0.0
    %265 = vmatprep.subr.mxu0 0.0
    %266 = vmatpush1.msra.mxu0 0.0
    %267 = vmatprep.subr.mxu0 0.0
    %268 = vmatpush1.msra.mxu0 0.0
    %269 = vmatprep.subr.mxu0 0.0
    %270 = vmatpush1.msra.mxu0 0.0
    %271 = vmatprep.subr.mxu0 0.0
    %272 = vmatpush1.msra.mxu0 0.0
    %273 = vmatprep.subr.mxu0 0.0
    %274 = vmatpush1.msra.mxu0 0.0
    %275 = vmatprep.subr.mxu0 0.0
    %276 = vmatpush1.msra.mxu0 0.0
    %277 = vmatprep.subr.mxu0 0.0
    %278 = vmatpush1.msra.mxu0 0.0
    %279 = vmatprep.subr.mxu0 0.0
    %280 = vmatpush1.msra.mxu0 0.0
    %281 = vmatprep.subr.mxu0 %v244
    %282 = vmatpush1.msra.mxu0 %v243
    %283 = vmatprep.subr.mxu0 %v242
    %284 = vmatpush1.msra.mxu0 %v241
    %285 = vmatprep.subr.mxu0 %v240
    %286 = vmatpush1.msra.mxu0 %v239
    %287 = vmatprep.subr.mxu0 %v238
    %288 = vmatpush1.msra.mxu0 %v237
    %289 = vmatprep.subr.mxu0 0.0
    %290 = vmatpush2.msra.mxu0 0.0
    %291 = vmatprep.subr.mxu0 0.0
    %292 = vmatpush2.msra.mxu0 0.0
    %293 = vmatprep.subr.mxu0 0.0
    %294 = vmatpush2.msra.mxu0 0.0
    %295 = vmatprep.subr.mxu0 0.0
    %296 = vmatpush2.msra.mxu0 0.0
    %297 = vmatprep.subr.mxu0 0.0
    %298 = vmatpush2.msra.mxu0 0.0
    %299 = vmatprep.subr.mxu0 0.0
    %300 = vmatpush2.msra.mxu0 0.0
    %301 = vmatprep.subr.mxu0 0.0
    %302 = vmatpush2.msra.mxu0 0.0
    %303 = vmatprep.subr.mxu0 0.0
    %304 = vmatpush2.msra.mxu0 0.0
    %305 = vmatprep.subr.mxu0 0.0
    %306 = vmatpush2.msra.mxu0 0.0
    %307 = vmatprep.subr.mxu0 0.0
    %308 = vmatpush2.msra.mxu0 0.0
    %309 = vmatprep.subr.mxu0 0.0
    %310 = vmatpush2.msra.mxu0 0.0
    %311 = vmatprep.subr.mxu0 0.0
    %312 = vmatpush2.msra.mxu0 0.0
    %313 = vmatprep.subr.mxu0 0.0
    %314 = vmatpush2.msra.mxu0 0.0
    %315 = vmatprep.subr.mxu0 0.0
    %316 = vmatpush2.msra.mxu0 0.0
    %317 = vmatprep.subr.mxu0 0.0
    %318 = vmatpush2.msra.mxu0 0.0
    %319 = vmatprep.subr.mxu0 0.0
    %320 = vmatpush2.msra.mxu0 0.0
    %321 = vmatprep.mubr.f32.mxu0 0.0
    %322 = vmatmul.mubr.f32.gmra.mxu0 %v246
    %v323 = vpop.f32.mrf.mxu0
    %v324 = vadd.f32 0.0, %v323
    %v325 = vpop.f32.mrf.mxu0
    %v326 = vadd.f32 0.0, %v325
    %327 = vmatprep.mubr.f32.mxu0 0.0
    %328 = vmatmul.mubr.f32.gmra.mxu0 %v249
    %v329 = vpop.f32.mrf.mxu0
    %v330 = vadd.f32 0.0, %v329
    %v331 = vpop.f32.mrf.mxu0
    %v332 = vadd.f32 0.0, %v331
    %333 = vmatprep.mubr.f32.mxu0 0.0
    %334 = vmatmul.mubr.f32.gmra.mxu0 %v252
    %v335 = vpop.f32.mrf.mxu0
    %v336 = vadd.f32 0.0, %v335
    %v337 = vpop.f32.mrf.mxu0
    %v338 = vadd.f32 0.0, %v337
    %339 = vmatprep.mubr.f32.mxu0 0.0
    %340 = vmatmul.mubr.f32.gmra.mxu0 %v255
    %v341 = vpop.f32.mrf.mxu0
    %v342 = vadd.f32 0.0, %v341
    %v343 = vpop.f32.mrf.mxu0
    %v344 = vadd.f32 0.0, %v343
    %345 = vdwg.mxu0
    %346 = vst [vmem:[%s2] sm:$0xff] %v324
    %347 = vst [vmem:[%s2 + $0x8] sm:$0xff] %v326
    %348 = vst [vmem:[%s2 + $0x10] sm:$0xff] %v330
    %349 = vst [vmem:[%s2 + $0x18] sm:$0xff] %v332
    %350 = vst [vmem:[%s2 + $0x20] sm:$0xff] %v336
    %351 = vst [vmem:[%s2 + $0x28] sm:$0xff] %v338
    %352 = vst [vmem:[%s2 + $0x30] sm:$0xff] %v342
    %353 = vst [vmem:[%s2 + $0x38] sm:$0xff] %v344
  $region17: #{classifier_mlp.2} parent=0 // pred_fallthru
    _
  // Predicated region
  $region18: #{classifier_mlp.2} parent=0 // pred_check
    _
  $region19: #{classifier_mlp.2} parent=0 // pred_check_branch
    %355 = sbr.rel (0) target = $region21
  $region20: #{classifier_mlp.2} parent=0 // pred_region
    _
  $region21: #{classifier_mlp.2} parent=0 // pred_fallthru
    _
  // Predicated region
  $region22: #{classifier_mlp.2} parent=0 // pred_check
    _
  $region23: #{classifier_mlp.2} parent=0 // pred_check_branch
    %357 = sbr.rel (0) target = $region25
  $region24: #{classifier_mlp.2} parent=0 // pred_region
    _
  $region25: #{classifier_mlp.2} parent=0 // pred_fallthru
    _

</llo_original>
